<compile_context>
chip_gen: v7x
topology: tpu7x:2x2x1
jax: 0.10.0
libtpu: 0.0.40
codegen_flags: <defaults>
</compile_context>

<pallas_src>
import math

import jax
import jax.numpy as jnp
from jax.experimental import pallas as pl
from jax.experimental.pallas import tpu as pltpu

_LANE = 128
_SUBLANE = 8
_TARGET_BLOCK_BYTES = 6 << 20     # ~6 MiB blocks (amortizes ~0.35us/step grid cost)
_VMEM_LIMIT_BYTES = 32 << 20      # 4 double-buffered 6 MiB bufs = 24 MiB < 32 MiB
                                  # (safe on v5e/v6e 128 MiB and v7x 64 MiB physical)


# ----------------------------------------------------------------------------
# Zero-copy identity: aliased output, no data movement.
# ----------------------------------------------------------------------------
def _touch_kernel(x_ref, o_ref):
    # Output buffer is aliased to the input buffer; no DMA needed.  touch()
    # pins the (fake) read+write dependency so the aliased output materializes.
    pltpu.touch(x_ref)
    pltpu.touch(o_ref)


def _zero_copy_identity(x: jax.Array) -> jax.Array:
    return pl.pallas_call(
        _touch_kernel,
        out_shape=jax.ShapeDtypeStruct(x.shape, x.dtype),
        in_specs=[pl.BlockSpec(memory_space=pl.ANY)],
        out_specs=pl.BlockSpec(memory_space=pl.ANY),
        input_output_aliases={0: 0},
    )(x)


_ZERO_COPY_OK = {"status": None}


def _zero_copy_supported() -> bool:
    """One-time probe: does the no-DMA aliased plan compile & return correct data?"""
    if _ZERO_COPY_OK["status"] is None:
        try:
            probe = jnp.arange(_SUBLANE * _LANE, dtype=jnp.float32).reshape(
                _SUBLANE, _LANE
            )
            out = jax.block_until_ready(_zero_copy_identity(probe))
            _ZERO_COPY_OK["status"] = bool(jnp.array_equal(out, probe))
        except Exception:  # lowering/compile failure -> use the copy fallback
            _ZERO_COPY_OK["status"] = False
    return _ZERO_COPY_OK["status"]


# ----------------------------------------------------------------------------
# Fallback: lane-dense, large-tile, aliased HBM->VMEM->HBM copy.
# ----------------------------------------------------------------------------
def _copy_kernel(x_ref, o_ref):
    o_ref[...] = x_ref[...]


def _copy_identity(x: jax.Array) -> jax.Array:
    orig_shape = x.shape
    total = math.prod(orig_shape)
    itemsize = jnp.dtype(x.dtype).itemsize

    # Widest lane-dense column width (multiple of 128) dividing the total,
    # while keeping at least 8 sublane rows.
    cols = None
    for cand in (4096, 2048, 1024, 512, 256, _LANE):
        if total % cand == 0 and (total // cand) >= _SUBLANE:
            cols = cand
            break

    if cols is None:
        # Tiny / oddly sized input: single full-array block in VMEM, output
        # aliased onto the input buffer.
        flat = x.reshape(1, total)
        out = pl.pallas_call(
            _copy_kernel,
            out_shape=jax.ShapeDtypeStruct(flat.shape, flat.dtype),
            in_specs=[pl.BlockSpec(memory_space=pltpu.MemorySpace.VMEM)],
            out_specs=pl.BlockSpec(memory_space=pltpu.MemorySpace.VMEM),
            input_output_aliases={0: 0},
        )(flat)
        return out.reshape(orig_shape)

    rows = total // cols
    x2 = x.reshape(rows, cols)

    # ~6 MiB per block, multiple of 8 sublanes.  No forced 2-way split:
    # single-TC chips (v5e/v6e) would only pay grid-step overhead, and arrays
    # big enough for v7x megacore to help already span >= 2 blocks.
    bytes_per_row = cols * itemsize
    target_rows = max(_SUBLANE, _TARGET_BLOCK_BYTES // bytes_per_row)
    block_rows = min(rows, target_rows)
    block_rows = max(_SUBLANE, (block_rows // _SUBLANE) * _SUBLANE)

    grid = (pl.cdiv(rows, block_rows),)
    out = pl.pallas_call(
        _copy_kernel,
        out_shape=jax.ShapeDtypeStruct((rows, cols), x2.dtype),
        grid=grid,
        in_specs=[pl.BlockSpec((block_rows, cols), lambda i: (i, 0))],
        out_specs=pl.BlockSpec((block_rows, cols), lambda i: (i, 0)),
        input_output_aliases={0: 0},
        compiler_params=pltpu.CompilerParams(
            dimension_semantics=("parallel",),
            vmem_limit_bytes=_VMEM_LIMIT_BYTES,
        ),
        cost_estimate=pl.CostEstimate(
            flops=0,
            transcendentals=0,
            bytes_accessed=2 * total * itemsize,
        ),
    )(x2)
    return out.reshape(orig_shape)


# ----------------------------------------------------------------------------
# Public forwards.
# ----------------------------------------------------------------------------
def att_ad_forward(x: jax.Array) -> jax.Array:
    """Pallas implementation of AttAd.forward (identity) for any input shape."""
    if x.size == 0:
        return x
    if _zero_copy_supported():
        return _zero_copy_identity(x)
    return _copy_identity(x)


def att_features_forward(x: jax.Array) -> jax.Array:
    """AttFeatures.forward == AttAd.forward (identity)."""
    return att_ad_forward(x)


if __name__ == "__main__":
    key = jax.random.PRNGKey(0)

    # Small shape consistent with the module's (batch, seq, dim=256) input
    # (original is (128, 16, 256)); exercises the primary (zero-copy) path.
    x = jax.random.normal(key, (2, 8, 256), dtype=jnp.float32)
    out = jax.block_until_ready(att_features_forward(x))
    assert out.shape == x.shape and out.dtype == x.dtype
    assert bool(jnp.array_equal(out, x))

    # Explicitly exercise the lane-dense tiled fallback copy path.
    x_copy = jax.random.normal(jax.random.PRNGKey(1), (8, 16, 256), dtype=jnp.float32)
    out_copy = jax.block_until_ready(_copy_identity(x_copy))
    assert out_copy.shape == x_copy.shape and out_copy.dtype == x_copy.dtype
    assert bool(jnp.array_equal(out_copy, x_copy))

    # Explicitly exercise the tiny/odd-size fallback path (total not % 128).
    x_tiny = jax.random.normal(jax.random.PRNGKey(2), (2, 3, 5), dtype=jnp.float32)
    out_tiny = jax.block_until_ready(_copy_identity(x_tiny))
    assert out_tiny.shape == x_tiny.shape and out_tiny.dtype == x_tiny.dtype
    assert bool(jnp.array_equal(out_tiny, x_tiny))

    print("KERNEL_OK")
</pallas_src>

<mosaic_0001>
module attributes {stable_mosaic.version = 11 : i64} {
  func.func @_touch_kernel(%arg0: memref<8x128xf32, #tpu.memory_space<any>>, %arg1: memref<8x128xf32, #tpu.memory_space<any>>) attributes {dimension_semantics = [], scalar_prefetch = 0 : i64, scratch_operands = 0 : i64, tpu.core_type = #tpu.core_type<tc>} {
    return
  }
}

module attributes {stable_mosaic.version = 11 : i64} {
  func.func @_copy_kernel(%arg0: i32, %arg1: memref<8x512xf32, #tpu.memory_space<vmem>>, %arg2: memref<8x512xf32, #tpu.memory_space<vmem>>) attributes {dimension_semantics = [#tpu.dimension_semantics<parallel>], iteration_bounds = array<i64: 1>, scalar_prefetch = 0 : i64, scratch_operands = 0 : i64, tpu.core_type = #tpu.core_type<tc>, window_params = [{transform_indices = @transform_0, window_bounds = array<i64: 8, 512>}, {transform_indices = @transform_1, window_bounds = array<i64: 8, 512>}]} {
    %c0 = arith.constant 0 : index
    %c0_0 = arith.constant 0 : index
    %0 = vector.load %arg1[%c0, %c0_0] : memref<8x512xf32, #tpu.memory_space<vmem>>, vector<8x512xf32>
    %c0_1 = arith.constant 0 : index
    %c0_2 = arith.constant 0 : index
    %1 = vector.load %arg2[%c0_1, %c0_2] : memref<8x512xf32, #tpu.memory_space<vmem>>, vector<8x512xf32>
    tpu.vector_store %arg2[%c0_1, %c0_2], %0 {strides = array<i32>} : memref<8x512xf32, #tpu.memory_space<vmem>>, vector<8x512xf32>,
    return
  }
  func.func @transform_0(%arg0: i32) -> (i32, i32) {
    %c0_i32 = arith.constant 0 : i32
    %c0_i32_0 = arith.constant 0 : i32
    return %arg0, %c0_i32 : i32, i32
  }
  func.func @transform_1(%arg0: i32) -> (i32, i32) {
    %c0_i32 = arith.constant 0 : i32
    %c0_i32_0 = arith.constant 0 : i32
    return %arg0, %c0_i32 : i32, i32
  }
}

</mosaic_0001>

<llo_original>
// kernel: tpu_custom_call.1
$region0: #{tpu_custom_call.1}
  #allocation0 [shape = 'u32[]', space=smem, size = 0x4, offset = 0x4, fixed_abs, tag = 'smem constant byte address 0x4 - core index']
  #allocation1 [shape = 'u32[144,128]{1,0:T(1,128)}', space=vmem, size = 0x12000, scoped, tag = 'internal scratch']
  %s0 = inlined_call_operand.hbm [shape: f32[8,128], index: 0, kind: input, shape index: {}, may-alias: {0,1}]
  %s1 = inlined_call_operand.hbm [shape: f32[8,128], index: 1, kind: output, shape index: {}, may-alias: {0,1}]
  %s2 = sld [smem:[#allocation0]]
  $region2: #{tpu_custom_call.1} parent=0
    _
  %s4 = ssub.s32 1, %s2
  %s5 = scalar_select 0, %s4, %s2

// kernel: tpu_custom_call.1
$region0: #{tpu_custom_call.1}
  #allocation0 [shape = 'u32[]', space=smem, size = 0x4, offset = 0x4, fixed_abs, tag = 'smem constant byte address 0x4 - core index']
  #allocation1 [shape = 'u32[144,128]{1,0:T(1,128)}', space=vmem, size = 0x12000, scoped, tag = 'internal scratch']
  %s0 = inlined_call_operand.hbm [shape: f32[8,512], index: 0, kind: input, shape index: {}, may-alias: {0,1}]
  %s1 = inlined_call_operand.hbm [shape: f32[8,512], index: 1, kind: output, shape index: {}, may-alias: {0,1}]
  %s2 = sld [smem:[#allocation0]]
  $region18: #{tpu_custom_call.1} parent=0
    _
  %s4 = ssub.s32 1, %s2
  %s5 = scalar_select 0, %s4, %s2
  $region1: #{tpu_custom_call.1} parent=0
    #allocation2 [shape = 'u8[16384]{0}', space=vmem, size = 0x4000, scoped, tag = 'input window, operand 0, single buffered']
    #allocation3 [shape = 's32[1]{0}', space=sflag, size = 0x4, scoped, tag = 'scoped memory for tpu_custom_call.1']
    #allocation4 [shape = 's32[1]{0}', space=sflag, size = 0x4, scoped, tag = 'scoped memory for tpu_custom_call.1']
    #allocation5 [shape = 'u8[16384]{0}', space=vmem, size = 0x4000, scoped, tag = 'output window, operand 0, single buffered']
    %6 = vsyncpa [#allocation3], 0
    %7 = vsyncpa [#allocation4], 0
    // Predicated region
    $region2: #{tpu_custom_call.1} parent=1 // pred_check
      _
    $region3: #{tpu_custom_call.1} parent=1 // pred_check_branch
      %9 = sbr.rel (0) target = $region5
    $region4: #{tpu_custom_call.1} parent=1 // pred_region
      %s11 = ssub.s32 512, 512
      %12 = vsyncadd [#allocation3], %s11
      %s14 = sshll.u32 [#allocation2], 4
      %s15 = int_to_ptr.vmem [resolvable:$true] %s14
      %17 = dma.hbm_to_vmem [thread:$0]  %s0, 512, %s15, [#allocation3]
    $region5: #{tpu_custom_call.1} parent=1 // pred_fallthru
      _
    // Predicated region
    $region6: #{tpu_custom_call.1} parent=1 // pred_check
      _
    $region7: #{tpu_custom_call.1} parent=1 // pred_check_branch
      %19 = sbr.rel (0) target = $region9
    $region8: #{tpu_custom_call.1} parent=1 // pred_region
      %20 = dma.done [#allocation3], 512
    $region9: #{tpu_custom_call.1} parent=1 // pred_fallthru
      _
    %v21 = vld [vmem:[#allocation2] sm:$0xff]
    %v22 = vld [vmem:[#allocation2 + $0x8] sm:$0xff]
    %v23 = vld [vmem:[#allocation2 + $0x10] sm:$0xff]
    %v24 = vld [vmem:[#allocation2 + $0x18] sm:$0xff]
    %25 = vst [vmem:[#allocation5] sm:$0xff] %v21
    %26 = vst [vmem:[#allocation5 + $0x8] sm:$0xff] %v22
    %27 = vst [vmem:[#allocation5 + $0x10] sm:$0xff] %v23
    %28 = vst [vmem:[#allocation5 + $0x18] sm:$0xff] %v24
    // Predicated region
    $region10: #{tpu_custom_call.1} parent=1 // pred_check
      _
    $region11: #{tpu_custom_call.1} parent=1 // pred_check_branch
      %30 = sbr.rel (0) target = $region13
    $region12: #{tpu_custom_call.1} parent=1 // pred_region
      %s32 = ssub.s32 512, 512
      %33 = vsyncadd [#allocation4], %s32
      %s35 = sshll.u32 [#allocation5], 4
      %s36 = int_to_ptr.vmem [resolvable:$true] %s35
      %38 = dma.vmem_to_hbm [thread:$0]  %s36, 512, %s1, [#allocation4]
    $region13: #{tpu_custom_call.1} parent=1 // pred_fallthru
      _
    // Predicated region
    $region14: #{tpu_custom_call.1} parent=1 // pred_check
      _
    $region15: #{tpu_custom_call.1} parent=1 // pred_check_branch
      %40 = sbr.rel (0) target = $region17
    $region16: #{tpu_custom_call.1} parent=1 // pred_region
      %41 = dma.done [#allocation4], 512
    $region17: #{tpu_custom_call.1} parent=1 // pred_fallthru
      _
    %42 = vsyncpa [#allocation3], 1
    %43 = vsyncpa [#allocation4], 1

</llo_original>
